<compile_context>
chip_gen: v6e
topology: v6e:2x2x1
jax: 0.10.0
libtpu: 0.0.40
codegen_flags: <defaults>
</compile_context>

<pallas_src>
import math
import functools

import jax
import jax.numpy as jnp
from jax import lax
from jax.experimental import pallas as pl
from jax.experimental.pallas import tpu as pltpu

_INV_SQRT2 = 1.0 / math.sqrt(2.0)


def _residual_block_kernel(x_ref, wt_ref, b_ref, o_ref, *, tn):
    # x_ref:  (tm, H)   rows with the full hidden dim (matmul contraction)
    # wt_ref: (H, tn)   pre-transposed weight tile (W^T) -> no in-kernel .T
    # b_ref:  (1, tn)   bias tile
    # o_ref:  (tm, tn)
    j = pl.program_id(0)                       # N (column-tile) grid axis
    col0 = pl.multiple_of(j * tn, tn)          # aligned start of this col tile
    x_res = x_ref[:, pl.ds(col0, tn)]          # residual slice, already in VMEM

    y = jnp.dot(x_ref[...], wt_ref[...], preferred_element_type=jnp.float32)
    y = y + b_ref[...].astype(jnp.float32)
    # Exact GELU (PyTorch nn.GELU default, approximate='none').
    g = 0.5 * y * (1.0 + lax.erf(y * _INV_SQRT2))
    o_ref[...] = (x_res.astype(jnp.float32) + g).astype(o_ref.dtype)


@functools.partial(jax.jit, static_argnames=("tm", "tn"))
def residual_block(x, w, b, *, tm=256, tn=512):
    """out = x + GELU(x @ W^T + b).  x: (B, S, H), w: (H, H), b: (H,)."""
    batch, seq, hidden = x.shape
    m = batch * seq

    x2 = x.reshape(m, hidden)
    wt = w.T                      # one-time transpose, amortized over all tiles
    b2 = b.reshape(1, hidden)

    # Row tile: as large as requested; block == full array dim is always legal.
    tm_eff = tm if m > tm else m
    # Column tile: tile the output dim only when it divides evenly (keeps the
    # in-kernel residual slice in-bounds); otherwise use the full hidden dim.
    if hidden > tn and hidden % tn == 0:
        tn_eff = tn
    else:
        tn_eff = hidden
    # TODO(synk): for very large hidden (f32 (H, tn) weight tile > ~16 MiB),
    # also tile the contraction (K) dim with an f32 scratch accumulator.

    num_m = pl.cdiv(m, tm_eff)        # partial last M block is masked by Pallas
    num_n = hidden // tn_eff          # exact by construction

    itemsize = jnp.dtype(x.dtype).itemsize
    cost = pl.CostEstimate(
        flops=2 * m * hidden * hidden,
        transcendentals=m * hidden,
        bytes_accessed=(2 * m * hidden + hidden * hidden + hidden) * itemsize,
    )

    kernel = functools.partial(_residual_block_kernel, tn=tn_eff)

    out2 = pl.pallas_call(
        kernel,
        out_shape=jax.ShapeDtypeStruct((m, hidden), x.dtype),
        grid_spec=pltpu.PrefetchScalarGridSpec(
            num_scalar_prefetch=0,
            # N outer / M inner: the (H, tn) weight tile index is constant over
            # the inner M loop, so the large operand is fetched once per j.
            grid=(num_n, num_m),
            in_specs=[
                pl.BlockSpec((tm_eff, hidden), lambda j, i: (i, 0)),   # x (full K)
                pl.BlockSpec((hidden, tn_eff), lambda j, i: (0, j)),   # W^T tile
                pl.BlockSpec((1, tn_eff), lambda j, i: (0, j)),        # bias tile
            ],
            out_specs=pl.BlockSpec((tm_eff, tn_eff), lambda j, i: (i, j)),
        ),
        compiler_params=pltpu.CompilerParams(
            dimension_semantics=("parallel", "parallel"),
        ),
        cost_estimate=cost,
    )(x2, wt, b2)

    return out2.reshape(batch, seq, hidden)


def _reference(x, w, b):
    y = jnp.einsum("bsh,oh->bso", x, w) + b
    return x + 0.5 * y * (1.0 + lax.erf(y * _INV_SQRT2))


if __name__ == "__main__":
    batch, seq, hidden = 2, 8, 128

    key = jax.random.PRNGKey(0)
    kx, kw, kb = jax.random.split(key, 3)

    # Deterministic synthetic parameters (same shapes as nn.Linear(hidden, hidden)).
    bound = 1.0 / math.sqrt(hidden)
    w = jax.random.uniform(kw, (hidden, hidden), jnp.float32, -bound, bound)
    b = jax.random.uniform(kb, (hidden,), jnp.float32, -bound, bound)
    x = jax.random.normal(kx, (batch, seq, hidden), jnp.float32)

    out = jax.block_until_ready(residual_block(x, w, b))

    ref = _reference(x, w, b)
    assert out.shape == x.shape
    assert jnp.allclose(out, ref, atol=1e-5, rtol=1e-5), "mismatch vs reference"

    print("KERNEL_OK")
</pallas_src>

<mosaic_0001>
module attributes {stable_mosaic.version = 11 : i64} {
  func.func @_residual_block_kernel(%arg0: i32, %arg1: i32, %arg2: memref<16x128xf32, #tpu.memory_space<vmem>>, %arg3: memref<128x128xf32, #tpu.memory_space<vmem>>, %arg4: memref<1x128xf32, #tpu.memory_space<vmem>>, %arg5: memref<16x128xf32, #tpu.memory_space<vmem>>) attributes {dimension_semantics = [#tpu.dimension_semantics<parallel>, #tpu.dimension_semantics<parallel>], iteration_bounds = array<i64: 1, 1>, scalar_prefetch = 0 : i64, scratch_operands = 0 : i64, tpu.core_type = #tpu.core_type<tc>, window_params = [{transform_indices = @transform_0, window_bounds = array<i64: 16, 128>}, {transform_indices = @transform_1, window_bounds = array<i64: 128, 128>}, {transform_indices = @transform_2, window_bounds = array<i64: 1, 128>}, {transform_indices = @transform_3, window_bounds = array<i64: 16, 128>}]} {
    %c128_i32 = arith.constant 128 : i32
    %0 = arith.muli %arg0, %c128_i32 : i32
    %1 = tpu.assume_multiple %0, 128 : i32
    %c0 = arith.constant 0 : index
    %2 = arith.index_cast %1 : i32 to index
    %3 = vector.load %arg2[%c0, %2] : memref<16x128xf32, #tpu.memory_space<vmem>>, vector<16x128xf32>
    %c0_0 = arith.constant 0 : index
    %c0_1 = arith.constant 0 : index
    %4 = vector.load %arg2[%c0_0, %c0_1] : memref<16x128xf32, #tpu.memory_space<vmem>>, vector<16x128xf32>
    %c0_2 = arith.constant 0 : index
    %c0_3 = arith.constant 0 : index
    %5 = vector.load %arg3[%c0_2, %c0_3] : memref<128x128xf32, #tpu.memory_space<vmem>>, vector<128x128xf32>
    %cst = arith.constant dense<0.000000e+00> : vector<16x128xf32>
    %6 = tpu.matmul %4, %5, %cst {dimension_numbers = #tpu.dot_dimension_numbers<[1], [0], [0], [1], [0, 0, 1, 1], [], []>} : vector<16x128xf32>, vector<128x128xf32>, vector<16x128xf32> -> vector<16x128xf32>
    %c0_4 = arith.constant 0 : index
    %c0_5 = arith.constant 0 : index
    %7 = vector.load %arg4[%c0_4, %c0_5] : memref<1x128xf32, #tpu.memory_space<vmem>>, vector<1x128xf32>
    %8 = vector.broadcast %7 : vector<1x128xf32> to vector<16x128xf32>
    %9 = arith.addf %6, %8 : vector<16x128xf32>
    %cst_6 = arith.constant 5.000000e-01 : f32
    %10 = vector.broadcast %cst_6 : f32 to vector<16x128xf32>
    %11 = arith.mulf %10, %9 : vector<16x128xf32>
    %cst_7 = arith.constant 0.707106769 : f32
    %12 = vector.broadcast %cst_7 : f32 to vector<16x128xf32>
    %13 = arith.mulf %9, %12 : vector<16x128xf32>
    %14 = math.erf %13 : vector<16x128xf32>
    %cst_8 = arith.constant 1.000000e+00 : f32
    %15 = vector.broadcast %cst_8 : f32 to vector<16x128xf32>
    %16 = arith.addf %15, %14 : vector<16x128xf32>
    %17 = arith.mulf %11, %16 : vector<16x128xf32>
    %18 = arith.addf %3, %17 : vector<16x128xf32>
    %c0_9 = arith.constant 0 : index
    %c0_10 = arith.constant 0 : index
    %19 = vector.load %arg5[%c0_9, %c0_10] : memref<16x128xf32, #tpu.memory_space<vmem>>, vector<16x128xf32>
    tpu.vector_store %arg5[%c0_9, %c0_10], %18 {strides = array<i32>} : memref<16x128xf32, #tpu.memory_space<vmem>>, vector<16x128xf32>,
    return
  }
  func.func @transform_0(%arg0: i32, %arg1: i32) -> (i32, i32) {
    %c0_i32 = arith.constant 0 : i32
    %c0_i32_0 = arith.constant 0 : i32
    return %arg1, %c0_i32 : i32, i32
  }
  func.func @transform_1(%arg0: i32, %arg1: i32) -> (i32, i32) {
    %c0_i32 = arith.constant 0 : i32
    %c0_i32_0 = arith.constant 0 : i32
    return %c0_i32, %arg0 : i32, i32
  }
  func.func @transform_2(%arg0: i32, %arg1: i32) -> (i32, i32) {
    %c0_i32 = arith.constant 0 : i32
    %c0_i32_0 = arith.constant 0 : i32
    return %c0_i32, %arg0 : i32, i32
  }
  func.func @transform_3(%arg0: i32, %arg1: i32) -> (i32, i32) {
    %c0_i32 = arith.constant 0 : i32
    return %arg1, %arg0 : i32, i32
  }
}

</mosaic_0001>

<llo_original>
// kernel: residual_block.1
$region0: #{residual_block.1}
  #allocation0 [shape = 'u32[]', space=smem, size = 0x4, offset = 0x4, fixed_abs, tag = 'smem constant byte address 0x4 - core index']
  #allocation1 [shape = 'u32[144,128]{1,0:T(1,128)}', space=vmem, size = 0x12000, scoped, tag = 'internal scratch']
  %s0 = inlined_call_operand.vmem [shape: f32[16,128], index: 0, kind: input, shape index: {}]
  %s1 = inlined_call_operand.vmem [shape: f32[128,128], index: 1, kind: input, shape index: {}]
  %s2 = inlined_call_operand.vmem [shape: f32[1,128], index: 2, kind: input, shape index: {}]
  %s3 = inlined_call_operand.hbm [shape: f32[16,128], index: 3, kind: output, shape index: {}]
  %s4 = sld [smem:[#allocation0]]
  $region22: #{residual_block.1} parent=0
    _
  %s6 = ssub.s32 1, %s4
  %s7 = scalar_select 0, %s6, %s4
  $region1: #{residual_block.1} parent=0
    #allocation2 [shape = 'u8[8192]{0}', space=vmem, size = 0x2000, scoped, tag = 'output window, operand 0, single buffered']
    #allocation3 [shape = 's32[1]{0}', space=sflag, size = 0x4, scoped, tag = 'scoped memory for residual_block.1']
    %8 = vsyncpa [#allocation3], 0
    // Predicated region
    $region2: #{residual_block.1} parent=1 // pred_check
      _
    $region3: #{residual_block.1} parent=1 // pred_check_branch
      %10 = sbr.rel (0) target = $region5
    $region4: #{residual_block.1} parent=1 // pred_region
      _
    $region5: #{residual_block.1} parent=1 // pred_fallthru
      _
    // Predicated region
    $region6: #{residual_block.1} parent=1 // pred_check
      _
    $region7: #{residual_block.1} parent=1 // pred_check_branch
      %12 = sbr.rel (0) target = $region9
    $region8: #{residual_block.1} parent=1 // pred_region
      _
    $region9: #{residual_block.1} parent=1 // pred_fallthru
      _
    // Predicated region
    $region10: #{residual_block.1} parent=1 // pred_check
      _
    $region11: #{residual_block.1} parent=1 // pred_check_branch
      %14 = sbr.rel (0) target = $region13
    $region12: #{residual_block.1} parent=1 // pred_region
      _
    $region13: #{residual_block.1} parent=1 // pred_fallthru
      _
    %s15 = smul.u32 0, 128
    %s16 = sshra.s32 %s15, 7
    %s17 = sand.u32 %s15, 127
    %s18 = scalar_lea.vmem %s0, %s16
    %v19 = vld [vmem:[%s18] sm:$0xff]
    %v20 = vld [vmem:[%s18 + $0x8] sm:$0xff]
    %v21 = vld [vmem:[%s0] sm:$0xff]
    %v22 = vld [vmem:[%s0 + $0x8] sm:$0xff]
    %v23 = vld [vmem:[%s1] sm:$0xff]
    %v24 = vld [vmem:[%s1 + $0x8] sm:$0xff]
    %v25 = vld [vmem:[%s1 + $0x10] sm:$0xff]
    %v26 = vld [vmem:[%s1 + $0x18] sm:$0xff]
    %v27 = vld [vmem:[%s1 + $0x20] sm:$0xff]
    %v28 = vld [vmem:[%s1 + $0x28] sm:$0xff]
    %v29 = vld [vmem:[%s1 + $0x30] sm:$0xff]
    %v30 = vld [vmem:[%s1 + $0x38] sm:$0xff]
    %v31 = vld [vmem:[%s1 + $0x40] sm:$0xff]
    %v32 = vld [vmem:[%s1 + $0x48] sm:$0xff]
    %v33 = vld [vmem:[%s1 + $0x50] sm:$0xff]
    %v34 = vld [vmem:[%s1 + $0x58] sm:$0xff]
    %v35 = vld [vmem:[%s1 + $0x60] sm:$0xff]
    %v36 = vld [vmem:[%s1 + $0x68] sm:$0xff]
    %v37 = vld [vmem:[%s1 + $0x70] sm:$0xff]
    %v38 = vld [vmem:[%s1 + $0x78] sm:$0xff]
    %v39 = vld [vmem:[%s2] sm:$0x1]
    %v41 = vlaneseq
    %v42 = vshrl.u32 %v41, 7
    %v43 = vsub.s32 0, %v42
    %v44 = vrot.slane %v39, %v43
    %46 = vmatprep.subr.mxu0 0.0
    %47 = vmatpush1.msra.mxu0 %v38
    %48 = vmatprep.subr.mxu0 0.0
    %49 = vmatpush1.msra.mxu0 %v37
    %50 = vmatprep.subr.mxu0 0.0
    %51 = vmatpush1.msra.mxu0 %v36
    %52 = vmatprep.subr.mxu0 0.0
    %53 = vmatpush1.msra.mxu0 %v35
    %54 = vmatprep.subr.mxu0 0.0
    %55 = vmatpush1.msra.mxu0 %v34
    %56 = vmatprep.subr.mxu0 0.0
    %57 = vmatpush1.msra.mxu0 %v33
    %58 = vmatprep.subr.mxu0 0.0
    %59 = vmatpush1.msra.mxu0 %v32
    %60 = vmatprep.subr.mxu0 0.0
    %61 = vmatpush1.msra.mxu0 %v31
    %62 = vmatprep.subr.mxu0 0.0
    %63 = vmatpush1.msra.mxu0 %v30
    %64 = vmatprep.subr.mxu0 0.0
    %65 = vmatpush1.msra.mxu0 %v29
    %66 = vmatprep.subr.mxu0 0.0
    %67 = vmatpush1.msra.mxu0 %v28
    %68 = vmatprep.subr.mxu0 0.0
    %69 = vmatpush1.msra.mxu0 %v27
    %70 = vmatprep.subr.mxu0 0.0
    %71 = vmatpush1.msra.mxu0 %v26
    %72 = vmatprep.subr.mxu0 0.0
    %73 = vmatpush1.msra.mxu0 %v25
    %74 = vmatprep.subr.mxu0 0.0
    %75 = vmatpush1.msra.mxu0 %v24
    %76 = vmatprep.subr.mxu0 0.0
    %77 = vmatpush1.msra.mxu0 %v23
    %78 = vmatprep.subr.mxu0 0.0
    %79 = vmatpush2.msra.mxu0 0.0
    %80 = vmatprep.subr.mxu0 0.0
    %81 = vmatpush2.msra.mxu0 0.0
    %82 = vmatprep.subr.mxu0 0.0
    %83 = vmatpush2.msra.mxu0 0.0
    %84 = vmatprep.subr.mxu0 0.0
    %85 = vmatpush2.msra.mxu0 0.0
    %86 = vmatprep.subr.mxu0 0.0
    %87 = vmatpush2.msra.mxu0 0.0
    %88 = vmatprep.subr.mxu0 0.0
    %89 = vmatpush2.msra.mxu0 0.0
    %90 = vmatprep.subr.mxu0 0.0
    %91 = vmatpush2.msra.mxu0 0.0
    %92 = vmatprep.subr.mxu0 0.0
    %93 = vmatpush2.msra.mxu0 0.0
    %94 = vmatprep.subr.mxu0 0.0
    %95 = vmatpush2.msra.mxu0 0.0
    %96 = vmatprep.subr.mxu0 0.0
    %97 = vmatpush2.msra.mxu0 0.0
    %98 = vmatprep.subr.mxu0 0.0
    %99 = vmatpush2.msra.mxu0 0.0
    %100 = vmatprep.subr.mxu0 0.0
    %101 = vmatpush2.msra.mxu0 0.0
    %102 = vmatprep.subr.mxu0 0.0
    %103 = vmatpush2.msra.mxu0 0.0
    %104 = vmatprep.subr.mxu0 0.0
    %105 = vmatpush2.msra.mxu0 0.0
    %106 = vmatprep.subr.mxu0 0.0
    %107 = vmatpush2.msra.mxu0 0.0
    %108 = vmatprep.subr.mxu0 0.0
    %109 = vmatpush2.msra.mxu0 0.0
    %110 = vmatprep.mubr.f32.mxu0 0.0
    %111 = vmatmul.mubr.f32.gmra.mxu0 %v21
    %v112 = vpop.f32.mrf.mxu0
    %v113 = vadd.f32 %v44, %v112
    %v114 = vpop.f32.mrf.mxu0
    %115 = vmatprep.mubr.f32.mxu0 0.0
    %116 = vmatmul.mubr.f32.gmra.mxu0 %v22
    %v117 = vpop.f32.mrf.mxu0
    %v118 = vadd.f32 %v44, %v117
    %v119 = vpop.f32.mrf.mxu0
    %120 = vdwg.mxu0
    %v121 = vmul.f32 %v113, 0.5
    %v122 = vmul.f32 %v118, 0.5
    %v123 = vmul.f32 %v113, 0.70710677
    %v124 = vmul.f32 %v118, 0.70710677
    %v125 = verf.f32.pop %v123
    %v126 = verf.f32.pop %v124
    %v127 = vadd.f32 %v125, 1.0
    %v128 = vadd.f32 %v126, 1.0
    %v129 = vmul.f32 %v121, %v127
    %v130 = vmul.f32 %v122, %v128
    %v131 = vadd.f32 %v19, %v129
    %v132 = vadd.f32 %v20, %v130
    %133 = vst [vmem:[#allocation2] sm:$0xff] %v131
    %134 = vst [vmem:[#allocation2 + $0x8] sm:$0xff] %v132
    // Predicated region
    $region14: #{residual_block.1} parent=1 // pred_check
      _
    $region15: #{residual_block.1} parent=1 // pred_check_branch
      %136 = sbr.rel (0) target = $region17
    $region16: #{residual_block.1} parent=1 // pred_region
      %s138 = ssub.s32 256, 256
      %139 = vsyncadd [#allocation3], %s138
      %s140 = sshll.u32 [#allocation2], 4
      %s141 = int_to_ptr.vmem [resolvable:$true] %s140
      %146 = dma.vmem_to_hbm [thread:$0]  %s141, 256, %s3, [#allocation3], 128, 128, 8
    $region17: #{residual_block.1} parent=1 // pred_fallthru
      _
    // Predicated region
    $region18: #{residual_block.1} parent=1 // pred_check
      _
    $region19: #{residual_block.1} parent=1 // pred_check_branch
      %148 = sbr.rel (0) target = $region21
    $region20: #{residual_block.1} parent=1 // pred_region
      %149 = dma.done [#allocation3], 256
    $region21: #{residual_block.1} parent=1 // pred_fallthru
      _
    %150 = vsyncpa [#allocation3], 1

</llo_original>
